<compile_context>
chip_gen: v7x
topology: tpu7x:2x2x1
jax: 0.10.0
libtpu: 0.0.40
codegen_flags: <defaults>
</compile_context>

<pallas_src>
import functools

import jax
import jax.numpy as jnp
from jax import lax
from jax.experimental import pallas as pl
from jax.experimental.pallas import tpu as pltpu


# ----------------------------------------------------------------------------
# kernel body
# ----------------------------------------------------------------------------
def _hybrid_body(x_ref, table_ref, label_ref, out_ref, gt_ref,
                 *, C, use_tanh, scale_tanh):
    x = x_ref[...]                                    # (TB, 3C) native dtype
    TB = x.shape[0]

    logits = x[:, :C]                                 # (TB, C)   static slice
    reg = x[:, C:]                                    # (TB, 2C)  interleaved

    # classification logits straight from the already-loaded tile (write-only)
    label_ref[...] = logits

    iota_c = lax.broadcasted_iota(jnp.int32, (TB, C), 1)

    if gt_ref is None:
        # eval path: argmax over the classification logits (first occurrence
        # on ties, matching torch.argmax / jnp.argmax).
        max_val = jnp.max(logits, axis=-1, keepdims=True)
        idx = jnp.min(jnp.where(logits == max_val, iota_c, C),
                      axis=-1, keepdims=True)         # (TB, 1) int32
    else:
        # train path: use the ground-truth cell indices.
        idx = gt_ref[...]                             # (TB, 1) int32

    # ---- quadtree table gather: one MXU matmul, pinned to full f32 precision
    onehot_c = (iota_c == idx).astype(jnp.float32)    # (TB, C)
    tab = jnp.dot(onehot_c, table_ref[...],
                  preferred_element_type=jnp.float32,
                  precision=lax.Precision.HIGHEST)     # (TB, 8)
    c_lat, c_lon = tab[:, 0:1], tab[:, 1:2]
    up_lat, up_lon = tab[:, 2:3], tab[:, 3:4]
    dn_lat, dn_lon = tab[:, 4:5], tab[:, 5:6]

    # ---- regression gather on the 2C interleaved slab:
    #      one dynamic compare + loop-invariant even/odd lane masks.
    iota_r = lax.broadcasted_iota(jnp.int32, (TB, 2 * C), 1)
    pair = (iota_r >> 1) == idx                       # (TB, 2C) dynamic compare
    is_even = (iota_r & 1) == 0                       # loop-invariant
    zero = jnp.zeros((), reg.dtype)
    r_lat = jnp.sum(jnp.where(pair & is_even, reg, zero),
                    axis=-1, keepdims=True).astype(jnp.float32)   # (TB, 1)
    r_lon = jnp.sum(jnp.where(pair & (~is_even), reg, zero),
                    axis=-1, keepdims=True).astype(jnp.float32)   # (TB, 1)

    if use_tanh:
        # one-hot selection commutes with tanh (tanh(0)=0): apply to the two
        # selected scalars per row, not to the whole regression slab.
        r_lat = scale_tanh * jnp.tanh(r_lat)
        r_lon = scale_tanh * jnp.tanh(r_lon)

    size_lat = jnp.where(r_lat > 0, up_lat, dn_lat)
    size_lon = jnp.where(r_lon > 0, up_lon, dn_lon)

    # gps = center + reg * size, then UnormGPS: clamp(-1, 1) * [90, 180]
    gps_lat = jnp.clip(c_lat + r_lat * size_lat, -1.0, 1.0) * 90.0
    gps_lon = jnp.clip(c_lon + r_lon * size_lon, -1.0, 1.0) * 180.0

    # single fused (TB, 8) output: [gps | 1/size | center | reg]
    out_ref[...] = jnp.concatenate(
        [gps_lat, gps_lon, 1.0 / size_lat, 1.0 / size_lon,
         c_lat, c_lon, r_lat, r_lon], axis=-1)


def _kernel_eval(x_ref, table_ref, label_ref, out_ref, *, C, use_tanh, scale_tanh):
    _hybrid_body(x_ref, table_ref, label_ref, out_ref, None,
                 C=C, use_tanh=use_tanh, scale_tanh=scale_tanh)


def _kernel_train(x_ref, gt_ref, table_ref, label_ref, out_ref,
                  *, C, use_tanh, scale_tanh):
    _hybrid_body(x_ref, table_ref, label_ref, out_ref, gt_ref,
                 C=C, use_tanh=use_tanh, scale_tanh=scale_tanh)


# ----------------------------------------------------------------------------
# tiling helpers
# ----------------------------------------------------------------------------
def _vmem_budget_bytes():
    try:
        phys = int(pltpu.get_tpu_info().vmem_capacity_bytes)
    except Exception:
        phys = 64 * 1024 * 1024
    # Treat the reported capacity as an upper bound but never assume more than
    # the smallest per-TensorCore VMEM across generations (v7x: 64 MiB), and
    # leave headroom for double-buffering / compiler scratch.
    per_tc = min(phys, 64 * 1024 * 1024)
    return min(int(per_tc * 0.75), 48 * 1024 * 1024)


def _pick_batch_tile(B, C, itemsize, budget_bytes):
    # per-row VMEM: double-buffered (TB, 3C) input + (TB, C) label output in
    # the native dtype, the tiny (TB, 8) packed output, and roughly eight
    # (TB, 2C)-sized f32/int32 in-kernel temporaries (iotas / masks / selects).
    bytes_per_row = (2 * 3 * C * itemsize      # input tile, double buffered
                     + 2 * C * itemsize        # label output tile
                     + 2 * 8 * 4               # packed output tile
                     + 8 * 2 * C * 4)          # in-kernel temporaries
    tb = budget_bytes // max(bytes_per_row, 1)
    tb = int(max(8, min(tb, 8192)))            # 8192: compile-time sanity cap
    # no point in a tile bigger than the (8-aligned) batch
    tb = min(tb, max(8, ((B + 7) // 8) * 8))
    tb = max(8, (tb // 8) * 8)
    return tb


# ----------------------------------------------------------------------------
# wrapper
# ----------------------------------------------------------------------------
def hybrid_head_centroid(x, gt_label, cell_center, cell_size_up, cell_size_down,
                         *, final_dim, use_tanh, scale_tanh,
                         training=False, block_b=None, vmem_limit_bytes=None):
    B = x.shape[0]
    C = final_dim
    assert x.shape[-1] == 3 * C, "expected x of shape (B, 3*final_dim)"

    # fused quadtree table (C, 8): [c_lat, c_lon, up_lat, up_lon, dn_lat, dn_lon, 0, 0]
    table = jnp.concatenate(
        [cell_center.astype(jnp.float32),
         cell_size_up.astype(jnp.float32),
         cell_size_down.astype(jnp.float32),
         jnp.zeros((C, 2), jnp.float32)], axis=-1)

    budget = _vmem_budget_bytes() if vmem_limit_bytes is None else int(vmem_limit_bytes)
    if block_b is not None:
        tb = block_b
    else:
        tb = _pick_batch_tile(B, C, jnp.dtype(x.dtype).itemsize, budget)
    tb = max(8, (min(int(tb), max(((B + 7) // 8) * 8, 8)) // 8) * 8)

    grid = (pl.cdiv(B, tb),)    # ragged last block handled by Pallas masking

    in_specs = [pl.BlockSpec((tb, 3 * C), lambda i: (i, 0))]     # x (native dtype)
    args = [x]
    if training:
        gt = gt_label.astype(jnp.int32).reshape(B, 1)
        in_specs.append(pl.BlockSpec((tb, 1), lambda i: (i, 0)))  # gt_label
        args.append(gt)
        kernel = functools.partial(_kernel_train, C=C,
                                   use_tanh=use_tanh, scale_tanh=scale_tanh)
    else:
        kernel = functools.partial(_kernel_eval, C=C,
                                   use_tanh=use_tanh, scale_tanh=scale_tanh)
    in_specs.append(pl.BlockSpec((C, 8), lambda i: (0, 0)))       # fused table
    args.append(table)

    label, out = pl.pallas_call(
        kernel,
        out_shape=(jax.ShapeDtypeStruct((B, C), x.dtype),     # logits
                   jax.ShapeDtypeStruct((B, 8), jnp.float32)), # packed results
        grid_spec=pltpu.PrefetchScalarGridSpec(
            num_scalar_prefetch=0,
            grid=grid,
            in_specs=in_specs,
            out_specs=[pl.BlockSpec((tb, C), lambda i: (i, 0)),
                       pl.BlockSpec((tb, 8), lambda i: (i, 0))],
        ),
        compiler_params=pltpu.CompilerParams(
            dimension_semantics=("parallel",),
            vmem_limit_bytes=int(budget)),
    )(*args)

    return {
        "label": label,
        "gps": out[:, 0:2],
        "size": out[:, 2:4],        # 1 / size
        "center": out[:, 4:6],
        "reg": out[:, 6:8],
    }


# ----------------------------------------------------------------------------
# pure-JAX reference of the PyTorch forward pass
# ----------------------------------------------------------------------------
def _reference(x, gt_label, cc, cu, cd, *, final_dim, use_tanh, scale_tanh,
               training):
    x = x.astype(jnp.float32)
    logits = x[:, :final_dim]
    classification = jnp.argmax(logits, axis=-1)
    reg = x[:, final_dim:]
    if use_tanh:
        reg = scale_tanh * jnp.tanh(reg)
    reg = reg.reshape(x.shape[0], -1, 2)
    idx = gt_label if training else classification
    reg_sel = jnp.take_along_axis(reg, idx[:, None, None], axis=1)[:, 0, :]
    size = jnp.where(reg_sel > 0, cu[idx], cd[idx])
    center = cc[idx]
    gps = center + reg_sel * size
    gps = jnp.clip(gps, -1.0, 1.0) * jnp.array([90.0, 180.0], jnp.float32)
    return {"label": logits, "gps": gps, "size": 1.0 / size,
            "center": center, "reg": reg_sel}


if __name__ == "__main__":
    key = jax.random.PRNGKey(0)
    final_dim = 128          # number of quadtree cells == number of classes
    use_tanh = True
    scale_tanh = 1.2

    k_x, k_gt, k_mean, k_up, k_dn = jax.random.split(key, 5)

    # deterministic synthetic quadtree (already normalized to [-1, 1])
    cell_center = jax.random.uniform(k_mean, (final_dim, 2),
                                     minval=-0.9, maxval=0.9)
    cell_size_up = jax.random.uniform(k_up, (final_dim, 2),
                                      minval=0.01, maxval=0.05)
    cell_size_down = jax.random.uniform(k_dn, (final_dim, 2),
                                        minval=0.01, maxval=0.05)

    def run_and_check(B, dtype, block_b=None, atol=1e-4, rtol=1e-4):
        kx, kg = jax.random.split(jax.random.fold_in(k_x, B), 2)
        x = jax.random.normal(kx, (B, 3 * final_dim), dtype=jnp.float32).astype(dtype)
        gt_label = jax.random.randint(kg, (B,), 0, final_dim, dtype=jnp.int32)
        for training in (False, True):
            out = hybrid_head_centroid(
                x, gt_label, cell_center, cell_size_up, cell_size_down,
                final_dim=final_dim, use_tanh=use_tanh, scale_tanh=scale_tanh,
                training=training, block_b=block_b)
            out = jax.tree_util.tree_map(jax.block_until_ready, out)
            ref = _reference(x, gt_label, cell_center, cell_size_up,
                             cell_size_down, final_dim=final_dim,
                             use_tanh=use_tanh, scale_tanh=scale_tanh,
                             training=training)
            for name in ("label", "gps", "size", "center", "reg"):
                got = out[name].astype(jnp.float32)
                assert jnp.allclose(got, ref[name], atol=atol, rtol=rtol), (
                    f"mismatch in '{name}' (B={B}, dtype={dtype}, "
                    f"training={training})")

    # f32 input, batch divisible by the tile
    run_and_check(16, jnp.float32)
    # f32 input, ragged batch -> exercises the cdiv grid / masked last block
    run_and_check(13, jnp.float32, block_b=8)
    # bf16 input stays bf16 through the kernel (native-dtype HBM path)
    run_and_check(16, jnp.bfloat16, atol=1e-2, rtol=1e-2)

    print("KERNEL_OK")
</pallas_src>

<mosaic_0001>
module attributes {stable_mosaic.version = 11 : i64} {
  func.func @_kernel_eval(%arg0: i32, %arg1: memref<16x384xf32, #tpu.memory_space<vmem>>, %arg2: memref<128x8xf32, #tpu.memory_space<vmem>>, %arg3: memref<16x128xf32, #tpu.memory_space<vmem>>, %arg4: memref<16x8xf32, #tpu.memory_space<vmem>>) attributes {dimension_semantics = [#tpu.dimension_semantics<parallel>], iteration_bounds = array<i64: 1>, scalar_prefetch = 0 : i64, scratch_operands = 0 : i64, tpu.core_type = #tpu.core_type<tc>, window_params = [{transform_indices = @transform_0, window_bounds = array<i64: 16, 384>}, {pipeline_mode = #tpu.pipeline_mode<synchronous>, transform_indices = @transform_1, window_bounds = array<i64: 128, 8>}, {transform_indices = @transform_2, window_bounds = array<i64: 16, 128>}, {transform_indices = @transform_3, window_bounds = array<i64: 16, 8>}]} {
    %c0 = arith.constant 0 : index
    %c0_0 = arith.constant 0 : index
    %0 = vector.load %arg1[%c0, %c0_0] : memref<16x384xf32, #tpu.memory_space<vmem>>, vector<16x384xf32>
    %1 = vector.extract_strided_slice %0 {offsets = [0, 0], sizes = [16, 128], strides = [1, 1]} : vector<16x384xf32> to vector<16x128xf32>
    %2 = vector.extract_strided_slice %0 {offsets = [0, 128], sizes = [16, 256], strides = [1, 1]} : vector<16x384xf32> to vector<16x256xf32>
    %c0_1 = arith.constant 0 : index
    %c0_2 = arith.constant 0 : index
    %3 = vector.load %arg3[%c0_1, %c0_2] : memref<16x128xf32, #tpu.memory_space<vmem>>, vector<16x128xf32>
    tpu.vector_store %arg3[%c0_1, %c0_2], %1 {strides = array<i32>} : memref<16x128xf32, #tpu.memory_space<vmem>>, vector<16x128xf32>,
    %4 = tpu.iota {dimensions = array<i32: 1>} : vector<16x128xi32>
    %cst = arith.constant dense<0xFF800000> : vector<16xf32>
    %5 = vector.multi_reduction <maximumf>, %1, %cst [1] : vector<16x128xf32> to vector<16xf32>
    %6 = vector.shape_cast %5 : vector<16xf32> to vector<16x1xf32>
    %7 = vector.broadcast %6 : vector<16x1xf32> to vector<16x128xf32>
    %8 = arith.cmpf oeq, %1, %7 : vector<16x128xf32>
    %c128_i32 = arith.constant 128 : i32
    %9 = vector.broadcast %c128_i32 : i32 to vector<16x128xi32>
    %10 = arith.select %8, %4, %9 : vector<16x128xi1>, vector<16x128xi32>
    %cst_3 = arith.constant dense<2147483647> : vector<16xi32>
    %11 = vector.multi_reduction <minsi>, %10, %cst_3 [1] : vector<16x128xi32> to vector<16xi32>
    %12 = vector.shape_cast %11 : vector<16xi32> to vector<16x1xi32>
    %13 = vector.broadcast %12 : vector<16x1xi32> to vector<16x128xi32>
    %14 = arith.cmpi eq, %4, %13 : vector<16x128xi32>
    %15 = arith.extui %14 : vector<16x128xi1> to vector<16x128xi32>
    %16 = arith.sitofp %15 : vector<16x128xi32> to vector<16x128xf32>
    %c0_4 = arith.constant 0 : index
    %c0_5 = arith.constant 0 : index
    %17 = vector.load %arg2[%c0_4, %c0_5] : memref<128x8xf32, #tpu.memory_space<vmem>>, vector<128x8xf32>
    %cst_6 = arith.constant dense<0.000000e+00> : vector<16x8xf32>
    %18 = tpu.matmul %16, %17, %cst_6 {dimension_numbers = #tpu.dot_dimension_numbers<[1], [0], [0], [1], [0, 0, 1, 1], [], []>, precision = #tpu.contract_precision<fp32>} : vector<16x128xf32>, vector<128x8xf32>, vector<16x8xf32> -> vector<16x8xf32>
    %19 = vector.extract_strided_slice %18 {offsets = [0, 0], sizes = [16, 1], strides = [1, 1]} : vector<16x8xf32> to vector<16x1xf32>
    %20 = vector.extract_strided_slice %18 {offsets = [0, 1], sizes = [16, 1], strides = [1, 1]} : vector<16x8xf32> to vector<16x1xf32>
    %21 = vector.extract_strided_slice %18 {offsets = [0, 2], sizes = [16, 1], strides = [1, 1]} : vector<16x8xf32> to vector<16x1xf32>
    %22 = vector.extract_strided_slice %18 {offsets = [0, 3], sizes = [16, 1], strides = [1, 1]} : vector<16x8xf32> to vector<16x1xf32>
    %23 = vector.extract_strided_slice %18 {offsets = [0, 4], sizes = [16, 1], strides = [1, 1]} : vector<16x8xf32> to vector<16x1xf32>
    %24 = vector.extract_strided_slice %18 {offsets = [0, 5], sizes = [16, 1], strides = [1, 1]} : vector<16x8xf32> to vector<16x1xf32>
    %25 = tpu.iota {dimensions = array<i32: 1>} : vector<16x256xi32>
    %c1_i32 = arith.constant 1 : i32
    %26 = vector.broadcast %c1_i32 : i32 to vector<16x256xi32>
    %27 = arith.shrsi %25, %26 : vector<16x256xi32>
    %28 = vector.broadcast %12 : vector<16x1xi32> to vector<16x256xi32>
    %29 = arith.cmpi eq, %27, %28 : vector<16x256xi32>
    %c1_i32_7 = arith.constant 1 : i32
    %30 = vector.broadcast %c1_i32_7 : i32 to vector<16x256xi32>
    %31 = arith.andi %25, %30 : vector<16x256xi32>
    %c0_i32 = arith.constant 0 : i32
    %32 = vector.broadcast %c0_i32 : i32 to vector<16x256xi32>
    %33 = arith.cmpi eq, %31, %32 : vector<16x256xi32>
    %34 = arith.andi %29, %33 : vector<16x256xi1>
    %cst_8 = arith.constant 0.000000e+00 : f32
    %35 = vector.broadcast %cst_8 : f32 to vector<16x256xf32>
    %36 = arith.select %34, %2, %35 : vector<16x256xi1>, vector<16x256xf32>
    %cst_9 = arith.constant dense<0.000000e+00> : vector<16xf32>
    %37 = vector.multi_reduction <add>, %36, %cst_9 [1] : vector<16x256xf32> to vector<16xf32>
    %38 = vector.shape_cast %37 : vector<16xf32> to vector<16x1xf32>
    %cst_10 = arith.constant dense<true> : vector<16x256xi1>
    %39 = arith.xori %33, %cst_10 : vector<16x256xi1>
    %40 = arith.andi %29, %39 : vector<16x256xi1>
    %cst_11 = arith.constant 0.000000e+00 : f32
    %41 = vector.broadcast %cst_11 : f32 to vector<16x256xf32>
    %42 = arith.select %40, %2, %41 : vector<16x256xi1>, vector<16x256xf32>
    %cst_12 = arith.constant dense<0.000000e+00> : vector<16xf32>
    %43 = vector.multi_reduction <add>, %42, %cst_12 [1] : vector<16x256xf32> to vector<16xf32>
    %44 = vector.shape_cast %43 : vector<16xf32> to vector<16x1xf32>
    %45 = math.tanh %38 : vector<16x1xf32>
    %cst_13 = arith.constant 1.200000e+00 : f32
    %46 = vector.broadcast %cst_13 : f32 to vector<16x1xf32>
    %47 = arith.mulf %46, %45 : vector<16x1xf32>
    %48 = math.tanh %44 : vector<16x1xf32>
    %cst_14 = arith.constant 1.200000e+00 : f32
    %49 = vector.broadcast %cst_14 : f32 to vector<16x1xf32>
    %50 = arith.mulf %49, %48 : vector<16x1xf32>
    %cst_15 = arith.constant 0.000000e+00 : f32
    %51 = vector.broadcast %cst_15 : f32 to vector<16x1xf32>
    %52 = arith.cmpf ogt, %47, %51 : vector<16x1xf32>
    %53 = arith.select %52, %21, %23 : vector<16x1xi1>, vector<16x1xf32>
    %cst_16 = arith.constant 0.000000e+00 : f32
    %54 = vector.broadcast %cst_16 : f32 to vector<16x1xf32>
    %55 = arith.cmpf ogt, %50, %54 : vector<16x1xf32>
    %56 = arith.select %55, %22, %24 : vector<16x1xi1>, vector<16x1xf32>
    %57 = arith.mulf %47, %53 : vector<16x1xf32>
    %58 = arith.addf %19, %57 : vector<16x1xf32>
    %cst_17 = arith.constant -1.000000e+00 : f32
    %cst_18 = arith.constant 1.000000e+00 : f32
    %59 = vector.broadcast %cst_17 : f32 to vector<16x1xf32>
    %60 = arith.maximumf %59, %58 : vector<16x1xf32>
    %61 = vector.broadcast %cst_18 : f32 to vector<16x1xf32>
    %62 = arith.minimumf %61, %60 : vector<16x1xf32>
    %cst_19 = arith.constant 9.000000e+01 : f32
    %63 = vector.broadcast %cst_19 : f32 to vector<16x1xf32>
    %64 = arith.mulf %62, %63 : vector<16x1xf32>
    %65 = arith.mulf %50, %56 : vector<16x1xf32>
    %66 = arith.addf %20, %65 : vector<16x1xf32>
    %cst_20 = arith.constant -1.000000e+00 : f32
    %cst_21 = arith.constant 1.000000e+00 : f32
    %67 = vector.broadcast %cst_20 : f32 to vector<16x1xf32>
    %68 = arith.maximumf %67, %66 : vector<16x1xf32>
    %69 = vector.broadcast %cst_21 : f32 to vector<16x1xf32>
    %70 = arith.minimumf %69, %68 : vector<16x1xf32>
    %cst_22 = arith.constant 1.800000e+02 : f32
    %71 = vector.broadcast %cst_22 : f32 to vector<16x1xf32>
    %72 = arith.mulf %70, %71 : vector<16x1xf32>
    %cst_23 = arith.constant 1.000000e+00 : f32
    %73 = vector.broadcast %cst_23 : f32 to vector<16x1xf32>
    %74 = arith.divf %73, %53 : vector<16x1xf32>
    %cst_24 = arith.constant 1.000000e+00 : f32
    %75 = vector.broadcast %cst_24 : f32 to vector<16x1xf32>
    %76 = arith.divf %75, %56 : vector<16x1xf32>
    %77 = tpu.concatenate %64, %72, %74, %76, %19, %20, %47, %50 in 1 : vector<16x1xf32>, vector<16x1xf32>, vector<16x1xf32>, vector<16x1xf32>, vector<16x1xf32>, vector<16x1xf32>, vector<16x1xf32>, vector<16x1xf32> -> vector<16x8xf32>
    %c0_25 = arith.constant 0 : index
    %c0_26 = arith.constant 0 : index
    %78 = vector.load %arg4[%c0_25, %c0_26] : memref<16x8xf32, #tpu.memory_space<vmem>>, vector<16x8xf32>
    tpu.vector_store %arg4[%c0_25, %c0_26], %77 {strides = array<i32>} : memref<16x8xf32, #tpu.memory_space<vmem>>, vector<16x8xf32>,
    return
  }
  func.func @transform_0(%arg0: i32) -> (i32, i32) {
    %c0_i32 = arith.constant 0 : i32
    %c0_i32_0 = arith.constant 0 : i32
    return %arg0, %c0_i32 : i32, i32
  }
  func.func @transform_1(%arg0: i32) -> (i32, i32) {
    %c0_i32 = arith.constant 0 : i32
    %c0_i32_0 = arith.constant 0 : i32
    %c0_i32_1 = arith.constant 0 : i32
    return %c0_i32, %c0_i32_0 : i32, i32
  }
  func.func @transform_2(%arg0: i32) -> (i32, i32) {
    %c0_i32 = arith.constant 0 : i32
    %c0_i32_0 = arith.constant 0 : i32
    return %arg0, %c0_i32 : i32, i32
  }
  func.func @transform_3(%arg0: i32) -> (i32, i32) {
    %c0_i32 = arith.constant 0 : i32
    %c0_i32_0 = arith.constant 0 : i32
    return %arg0, %c0_i32 : i32, i32
  }
}

</mosaic_0001>

<llo_original>
// kernel: tpu_custom_call.1
$region0: #{tpu_custom_call.1}
  #allocation0 [shape = 'u32[]', space=smem, size = 0x4, offset = 0x4, fixed_abs, tag = 'smem constant byte address 0x4 - core index']
  #allocation1 [shape = 'u32[144,128]{1,0:T(1,128)}', space=vmem, size = 0x12000, scoped, tag = 'internal scratch']
  %s0 = inlined_call_operand.vmem [shape: f32[16,384], index: 0, kind: input, shape index: {}]
  %s1 = inlined_call_operand.vmem [shape: f32[128,8], index: 1, kind: input, shape index: {}]
  %s2 = inlined_call_operand.hbm [shape: f32[16,128], index: 2, kind: output, shape index: {0}]
  %s3 = inlined_call_operand.vmem [shape: f32[16,8], index: 3, kind: output, shape index: {1}]
  %4 = xla_tuple %s2, %s3
  %s5 = sld [smem:[#allocation0]]
  $region26: #{tpu_custom_call.1} parent=0
    _
  %s7 = ssub.s32 1, %s5
  %s8 = scalar_select 0, %s7, %s5
  $region1: #{tpu_custom_call.1} parent=0
    #allocation2 [shape = 'u8[8192]{0}', space=vmem, size = 0x2000, scoped, tag = 'output window, operand 0, single buffered']
    #allocation3 [shape = 's32[1]{0}', space=sflag, size = 0x4, scoped, tag = 'scoped memory for tpu_custom_call.1']
    %9 = vsyncpa [#allocation3], 0
    // Predicated region
    $region2: #{tpu_custom_call.1} parent=1 // pred_check
      _
    $region3: #{tpu_custom_call.1} parent=1 // pred_check_branch
      %11 = sbr.rel (0) target = $region5
    $region4: #{tpu_custom_call.1} parent=1 // pred_region
      _
    $region5: #{tpu_custom_call.1} parent=1 // pred_fallthru
      _
    // Predicated region
    $region6: #{tpu_custom_call.1} parent=1 // pred_check
      _
    $region7: #{tpu_custom_call.1} parent=1 // pred_check_branch
      %13 = sbr.rel (0) target = $region9
    $region8: #{tpu_custom_call.1} parent=1 // pred_region
      _
    $region9: #{tpu_custom_call.1} parent=1 // pred_fallthru
      _
    %v14 = vld [vmem:[%s0] sm:$0xff]
    %v15 = vld [vmem:[%s0 + $0x8] sm:$0xff]
    %v16 = vld [vmem:[%s0 + $0x10] sm:$0xff]
    %v17 = vld [vmem:[%s0 + $0x18] sm:$0xff]
    %v18 = vld [vmem:[%s0 + $0x20] sm:$0xff]
    %v19 = vld [vmem:[%s0 + $0x28] sm:$0xff]
    %20 = vst [vmem:[#allocation2] sm:$0xff] %v14
    %21 = vst [vmem:[#allocation2 + $0x8] sm:$0xff] %v17
    %v22 = vlaneseq
    %v23 = vand.u32 %v22, 127
    %24 = vmax.xlane.f32.xlu0 %v14
    %v25 = vpop.xlane.xlu0 %24
    %26 = vmax.xlane.f32.xlu0 %v17
    %v27 = vpop.xlane.xlu0 %26
    %vm28 = vcmp.eq.f32.partialorder %v14, %v25
    %vm29 = vcmp.eq.f32.partialorder %v17, %v27
    %v30 = vsel %vm28, %v23, 128
    %v31 = vsel %vm29, %v23, 128
    %v32 = vand.u32 %v30, 65535
    %v33 = vshra.s32 %v30, 16
    %v34 = vcvt.s32.f32 %v32
    %v35 = vcvt.s32.f32 %v33
    %36 = vmin.xlane.f32.xlu0 %v35
    %v37 = vpop.xlane.xlu0 %36
    %vm38 = vcmp.eq.f32.partialorder %v35, %v37
    %v39 = vsel %vm38, %v34, inf
    %40 = vmin.xlane.f32.xlu0 %v39
    %v41 = vpop.xlane.xlu0 %40
    %v42 = vcvt.f32.s32 %v41
    %v43 = vcvt.f32.s32 %v37
    %v44 = vshll.u32 %v43, 16
    %v45 = vadd.s32 %v44, %v42
    %v46 = vand.u32 %v31, 65535
    %v47 = vshra.s32 %v31, 16
    %v48 = vcvt.s32.f32 %v46
    %v49 = vcvt.s32.f32 %v47
    %50 = vmin.xlane.f32.xlu0 %v49
    %v51 = vpop.xlane.xlu0 %50
    %vm52 = vcmp.eq.f32.partialorder %v49, %v51
    %v53 = vsel %vm52, %v48, inf
    %54 = vmin.xlane.f32.xlu0 %v53
    %v55 = vpop.xlane.xlu0 %54
    %v56 = vcvt.f32.s32 %v55
    %v57 = vcvt.f32.s32 %v51
    %v58 = vshll.u32 %v57, 16
    %v59 = vadd.s32 %v58, %v56
    %vm60 = vcmp.eq.s32.totalorder %v23, %v45
    %vm61 = vcmp.eq.s32.totalorder %v23, %v59
    %v62 = vsel %vm60, 1, 0
    %v63 = vsel %vm61, 1, 0
    %v64 = vcvt.s32.f32 %v62
    %v65 = vcvt.s32.f32 %v63
    %v66 = vld [vmem:[%s1] sm:$0xff]
    %v67 = vld [vmem:[%s1 + $0x8] sm:$0xff]
    %v68 = vld [vmem:[%s1 + $0x10] sm:$0xff]
    %v69 = vld [vmem:[%s1 + $0x18] sm:$0xff]
    %v70 = vld [vmem:[%s1 + $0x20] sm:$0xff]
    %v71 = vld [vmem:[%s1 + $0x28] sm:$0xff]
    %v72 = vld [vmem:[%s1 + $0x30] sm:$0xff]
    %v73 = vld [vmem:[%s1 + $0x38] sm:$0xff]
    %v74 = vld [vmem:[%s1 + $0x40] sm:$0xff]
    %v75 = vld [vmem:[%s1 + $0x48] sm:$0xff]
    %v76 = vld [vmem:[%s1 + $0x50] sm:$0xff]
    %v77 = vld [vmem:[%s1 + $0x58] sm:$0xff]
    %v78 = vld [vmem:[%s1 + $0x60] sm:$0xff]
    %v79 = vld [vmem:[%s1 + $0x68] sm:$0xff]
    %v80 = vld [vmem:[%s1 + $0x70] sm:$0xff]
    %v81 = vld [vmem:[%s1 + $0x78] sm:$0xff]
    %82 = vmatprep.subr.mxu0 0.0
    %v83 = vand.u32 %v66, 4294901760
    %84 = vmatpush1.msra.mxu0 %v83
    %85 = vmatprep.subr.mxu0 0.0
    %v86 = vand.u32 %v67, 4294901760
    %87 = vmatpush1.msra.mxu0 %v86
    %88 = vmatprep.subr.mxu0 0.0
    %v89 = vand.u32 %v68, 4294901760
    %90 = vmatpush1.msra.mxu0 %v89
    %91 = vmatprep.subr.mxu0 0.0
    %v92 = vand.u32 %v69, 4294901760
    %93 = vmatpush1.msra.mxu0 %v92
    %94 = vmatprep.subr.mxu0 0.0
    %v95 = vand.u32 %v70, 4294901760
    %96 = vmatpush1.msra.mxu0 %v95
    %97 = vmatprep.subr.mxu0 0.0
    %v98 = vand.u32 %v71, 4294901760
    %99 = vmatpush1.msra.mxu0 %v98
    %100 = vmatprep.subr.mxu0 0.0
    %v101 = vand.u32 %v72, 4294901760
    %102 = vmatpush1.msra.mxu0 %v101
    %103 = vmatprep.subr.mxu0 0.0
    %v104 = vand.u32 %v73, 4294901760
    %105 = vmatpush1.msra.mxu0 %v104
    %106 = vmatprep.subr.mxu0 0.0
    %v107 = vand.u32 %v74, 4294901760
    %108 = vmatpush1.msra.mxu0 %v107
    %109 = vmatprep.subr.mxu0 0.0
    %v110 = vand.u32 %v75, 4294901760
    %111 = vmatpush1.msra.mxu0 %v110
    %112 = vmatprep.subr.mxu0 0.0
    %v113 = vand.u32 %v76, 4294901760
    %114 = vmatpush1.msra.mxu0 %v113
    %115 = vmatprep.subr.mxu0 0.0
    %v116 = vand.u32 %v77, 4294901760
    %117 = vmatpush1.msra.mxu0 %v116
    %118 = vmatprep.subr.mxu0 0.0
    %v119 = vand.u32 %v78, 4294901760
    %120 = vmatpush1.msra.mxu0 %v119
    %121 = vmatprep.subr.mxu0 0.0
    %v122 = vand.u32 %v79, 4294901760
    %123 = vmatpush1.msra.mxu0 %v122
    %124 = vmatprep.subr.mxu0 0.0
    %v125 = vand.u32 %v80, 4294901760
    %126 = vmatpush1.msra.mxu0 %v125
    %127 = vmatprep.subr.mxu0 0.0
    %v128 = vand.u32 %v81, 4294901760
    %129 = vmatpush1.msra.mxu0 %v128
    %130 = vmatprep.subr.mxu0 0.0
    %131 = vmatpush1.msra.mxu0 0.0
    %132 = vmatprep.subr.mxu0 0.0
    %133 = vmatpush1.msra.mxu0 0.0
    %134 = vmatprep.subr.mxu0 0.0
    %135 = vmatpush1.msra.mxu0 0.0
    %136 = vmatprep.subr.mxu0 0.0
    %137 = vmatpush1.msra.mxu0 0.0
    %138 = vmatprep.subr.mxu0 0.0
    %139 = vmatpush1.msra.mxu0 0.0
    %140 = vmatprep.subr.mxu0 0.0
    %141 = vmatpush1.msra.mxu0 0.0
    %142 = vmatprep.subr.mxu0 0.0
    %143 = vmatpush1.msra.mxu0 0.0
    %144 = vmatprep.subr.mxu0 0.0
    %145 = vmatpush1.msra.mxu0 0.0
    %146 = vmatprep.subr.mxu0 0.0
    %147 = vmatpush1.msra.mxu0 0.0
    %148 = vmatprep.subr.mxu0 0.0
    %149 = vmatpush1.msra.mxu0 0.0
    %150 = vmatprep.subr.mxu0 0.0
    %151 = vmatpush1.msra.mxu0 0.0
    %152 = vmatprep.subr.mxu0 0.0
    %153 = vmatpush1.msra.mxu0 0.0
    %154 = vmatprep.subr.mxu0 0.0
    %155 = vmatpush1.msra.mxu0 0.0
    %156 = vmatprep.subr.mxu0 0.0
    %157 = vmatpush1.msra.mxu0 0.0
    %158 = vmatprep.subr.mxu0 0.0
    %159 = vmatpush1.msra.mxu0 0.0
    %160 = vmatprep.subr.mxu0 0.0
    %161 = vmatpush1.msra.mxu0 0.0
    %162 = vmatprep.mubr.f32.mxu0 0.0
    %v163 = vand.u32 %v64, 4294901760
    %v164 = vsub.f32 %v64, %v163
    %v165 = vand.u32 %v164, 4294901760
    %v166 = vsub.f32 %v164, %v165
    %v167 = vand.u32 %v166, 4294901760
    %168 = vmatmul.mubr.f32.gmra.mrb[0].mxu0 %v167
    %v169 = vpop.f32.mrb[0].mxu0
    %v170 = vadd.f32 0.0, %v169
    %v171 = vpop.f32.mrb[0].mxu0
    %172 = vmatprep.mubr.f32.mxu0 0.0
    %v173 = vand.u32 %v65, 4294901760
    %v174 = vsub.f32 %v65, %v173
    %v175 = vand.u32 %v174, 4294901760
    %v176 = vsub.f32 %v174, %v175
    %v177 = vand.u32 %v176, 4294901760
    %178 = vmatmul.mubr.f32.gmra.mrb[0].mxu0 %v177
    %v179 = vpop.f32.mrb[0].mxu0
    %v180 = vadd.f32 0.0, %v179
    %v181 = vpop.f32.mrb[0].mxu0
    %182 = vdwg.mxu0
    %183 = vmatprep.subr.mxu0 0.0
    %v184 = vand.u32 %v66, 4294901760
    %v185 = vsub.f32 %v66, %v184
    %v186 = vand.u32 %v185, 4294901760
    %v187 = vsub.f32 %v185, %v186
    %v188 = vand.u32 %v187, 4294901760
    %189 = vmatpush1.msra.mxu0 %v188
    %190 = vmatprep.subr.mxu0 0.0
    %v191 = vand.u32 %v67, 4294901760
    %v192 = vsub.f32 %v67, %v191
    %v193 = vand.u32 %v192, 4294901760
    %v194 = vsub.f32 %v192, %v193
    %v195 = vand.u32 %v194, 4294901760
    %196 = vmatpush1.msra.mxu0 %v195
    %197 = vmatprep.subr.mxu0 0.0
    %v198 = vand.u32 %v68, 4294901760
    %v199 = vsub.f32 %v68, %v198
    %v200 = vand.u32 %v199, 4294901760
    %v201 = vsub.f32 %v199, %v200
    %v202 = vand.u32 %v201, 4294901760
    %203 = vmatpush1.msra.mxu0 %v202
    %204 = vmatprep.subr.mxu0 0.0
    %v205 = vand.u32 %v69, 4294901760
    %v206 = vsub.f32 %v69, %v205
    %v207 = vand.u32 %v206, 4294901760
    %v208 = vsub.f32 %v206, %v207
    %v209 = vand.u32 %v208, 4294901760
    %210 = vmatpush1.msra.mxu0 %v209
    %211 = vmatprep.subr.mxu0 0.0
    %v212 = vand.u32 %v70, 4294901760
    %v213 = vsub.f32 %v70, %v212
    %v214 = vand.u32 %v213, 4294901760
    %v215 = vsub.f32 %v213, %v214
    %v216 = vand.u32 %v215, 4294901760
    %217 = vmatpush1.msra.mxu0 %v216
    %218 = vmatprep.subr.mxu0 0.0
    %v219 = vand.u32 %v71, 4294901760
    %v220 = vsub.f32 %v71, %v219
    %v221 = vand.u32 %v220, 4294901760
    %v222 = vsub.f32 %v220, %v221
    %v223 = vand.u32 %v222, 4294901760
    %224 = vmatpush1.msra.mxu0 %v223
    %225 = vmatprep.subr.mxu0 0.0
    %v226 = vand.u32 %v72, 4294901760
    %v227 = vsub.f32 %v72, %v226
    %v228 = vand.u32 %v227, 4294901760
    %v229 = vsub.f32 %v227, %v228
    %v230 = vand.u32 %v229, 4294901760
    %231 = vmatpush1.msra.mxu0 %v230
    %232 = vmatprep.subr.mxu0 0.0
    %v233 = vand.u32 %v73, 4294901760
    %v234 = vsub.f32 %v73, %v233
    %v235 = vand.u32 %v234, 4294901760
    %v236 = vsub.f32 %v234, %v235
    %v237 = vand.u32 %v236, 4294901760
    %238 = vmatpush1.msra.mxu0 %v237
    %239 = vmatprep.subr.mxu0 0.0
    %v240 = vand.u32 %v74, 4294901760
    %v241 = vsub.f32 %v74, %v240
    %v242 = vand.u32 %v241, 4294901760
    %v243 = vsub.f32 %v241, %v242
    %v244 = vand.u32 %v243, 4294901760
    %245 = vmatpush1.msra.mxu0 %v244
    %246 = vmatprep.subr.mxu0 0.0
    %v247 = vand.u32 %v75, 4294901760
    %v248 = vsub.f32 %v75, %v247
    %v249 = vand.u32 %v248, 4294901760
    %v250 = vsub.f32 %v248, %v249
    %v251 = vand.u32 %v250, 4294901760
    %252 = vmatpush1.msra.mxu0 %v251
    %253 = vmatprep.subr.mxu0 0.0
    %v254 = vand.u32 %v76, 4294901760
    %v255 = vsub.f32 %v76, %v254
    %v256 = vand.u32 %v255, 4294901760
    %v257 = vsub.f32 %v255, %v256
    %v258 = vand.u32 %v257, 4294901760
    %259 = vmatpush1.msra.mxu0 %v258
    %260 = vmatprep.subr.mxu0 0.0
    %v261 = vand.u32 %v77, 4294901760
    %v262 = vsub.f32 %v77, %v261
    %v263 = vand.u32 %v262, 4294901760
    %v264 = vsub.f32 %v262, %v263
    %v265 = vand.u32 %v264, 4294901760
    %266 = vmatpush1.msra.mxu0 %v265
    %267 = vmatprep.subr.mxu0 0.0
    %v268 = vand.u32 %v78, 4294901760
    %v269 = vsub.f32 %v78, %v268
    %v270 = vand.u32 %v269, 4294901760
    %v271 = vsub.f32 %v269, %v270
    %v272 = vand.u32 %v271, 4294901760
    %273 = vmatpush1.msra.mxu0 %v272
    %274 = vmatprep.subr.mxu0 0.0
    %v275 = vand.u32 %v79, 4294901760
    %v276 = vsub.f32 %v79, %v275
    %v277 = vand.u32 %v276, 4294901760
    %v278 = vsub.f32 %v276, %v277
    %v279 = vand.u32 %v278, 4294901760
    %280 = vmatpush1.msra.mxu0 %v279
    %281 = vmatprep.subr.mxu0 0.0
    %v282 = vand.u32 %v80, 4294901760
    %v283 = vsub.f32 %v80, %v282
    %v284 = vand.u32 %v283, 4294901760
    %v285 = vsub.f32 %v283, %v284
    %v286 = vand.u32 %v285, 4294901760
    %287 = vmatpush1.msra.mxu0 %v286
    %288 = vmatprep.subr.mxu0 0.0
    %v289 = vand.u32 %v81, 4294901760
    %v290 = vsub.f32 %v81, %v289
    %v291 = vand.u32 %v290, 4294901760
    %v292 = vsub.f32 %v290, %v291
    %v293 = vand.u32 %v292, 4294901760
    %294 = vmatpush1.msra.mxu0 %v293
    %295 = vmatprep.subr.mxu0 0.0
    %296 = vmatpush1.msra.mxu0 0.0
    %297 = vmatprep.subr.mxu0 0.0
    %298 = vmatpush1.msra.mxu0 0.0
    %299 = vmatprep.subr.mxu0 0.0
    %300 = vmatpush1.msra.mxu0 0.0
    %301 = vmatprep.subr.mxu0 0.0
    %302 = vmatpush1.msra.mxu0 0.0
    %303 = vmatprep.subr.mxu0 0.0
    %304 = vmatpush1.msra.mxu0 0.0
    %305 = vmatprep.subr.mxu0 0.0
    %306 = vmatpush1.msra.mxu0 0.0
    %307 = vmatprep.subr.mxu0 0.0
    %308 = vmatpush1.msra.mxu0 0.0
    %309 = vmatprep.subr.mxu0 0.0
    %310 = vmatpush1.msra.mxu0 0.0
    %311 = vmatprep.subr.mxu0 0.0
    %312 = vmatpush1.msra.mxu0 0.0
    %313 = vmatprep.subr.mxu0 0.0
    %314 = vmatpush1.msra.mxu0 0.0
    %315 = vmatprep.subr.mxu0 0.0
    %316 = vmatpush1.msra.mxu0 0.0
    %317 = vmatprep.subr.mxu0 0.0
    %318 = vmatpush1.msra.mxu0 0.0
    %319 = vmatprep.subr.mxu0 0.0
    %320 = vmatpush1.msra.mxu0 0.0
    %321 = vmatprep.subr.mxu0 0.0
    %322 = vmatpush1.msra.mxu0 0.0
    %323 = vmatprep.subr.mxu0 0.0
    %324 = vmatpush1.msra.mxu0 0.0
    %325 = vmatprep.subr.mxu0 0.0
    %326 = vmatpush1.msra.mxu0 0.0
    %327 = vmatprep.mubr.f32.mxu0 0.0
    %v328 = vand.u32 %v64, 4294901760
    %329 = vmatmul.mubr.f32.gmra.mrb[0].mxu0 %v328
    %v330 = vpop.f32.mrb[0].mxu0
    %v331 = vadd.f32 %v170, %v330
    %v332 = vpop.f32.mrb[0].mxu0
    %333 = vmatprep.mubr.f32.mxu0 0.0
    %v334 = vand.u32 %v65, 4294901760
    %335 = vmatmul.mubr.f32.gmra.mrb[0].mxu0 %v334
    %v336 = vpop.f32.mrb[0].mxu0
    %v337 = vadd.f32 %v180, %v336
    %v338 = vpop.f32.mrb[0].mxu0
    %339 = vdwg.mxu0
    %340 = vmatprep.subr.mxu0 0.0
    %v341 = vand.u32 %v66, 4294901760
    %v342 = vsub.f32 %v66, %v341
    %343 = vmatpush1.msra.mxu0 %v342
    %344 = vmatprep.subr.mxu0 0.0
    %v345 = vand.u32 %v67, 4294901760
    %v346 = vsub.f32 %v67, %v345
    %347 = vmatpush1.msra.mxu0 %v346
    %348 = vmatprep.subr.mxu0 0.0
    %v349 = vand.u32 %v68, 4294901760
    %v350 = vsub.f32 %v68, %v349
    %351 = vmatpush1.msra.mxu0 %v350
    %352 = vmatprep.subr.mxu0 0.0
    %v353 = vand.u32 %v69, 4294901760
    %v354 = vsub.f32 %v69, %v353
    %355 = vmatpush1.msra.mxu0 %v354
    %356 = vmatprep.subr.mxu0 0.0
    %v357 = vand.u32 %v70, 4294901760
    %v358 = vsub.f32 %v70, %v357
    %359 = vmatpush1.msra.mxu0 %v358
    %360 = vmatprep.subr.mxu0 0.0
    %v361 = vand.u32 %v71, 4294901760
    %v362 = vsub.f32 %v71, %v361
    %363 = vmatpush1.msra.mxu0 %v362
    %364 = vmatprep.subr.mxu0 0.0
    %v365 = vand.u32 %v72, 4294901760
    %v366 = vsub.f32 %v72, %v365
    %367 = vmatpush1.msra.mxu0 %v366
    %368 = vmatprep.subr.mxu0 0.0
    %v369 = vand.u32 %v73, 4294901760
    %v370 = vsub.f32 %v73, %v369
    %371 = vmatpush1.msra.mxu0 %v370
    %372 = vmatprep.subr.mxu0 0.0
    %v373 = vand.u32 %v74, 4294901760
    %v374 = vsub.f32 %v74, %v373
    %375 = vmatpush1.msra.mxu0 %v374
    %376 = vmatprep.subr.mxu0 0.0
    %v377 = vand.u32 %v75, 4294901760
    %v378 = vsub.f32 %v75, %v377
    %379 = vmatpush1.msra.mxu0 %v378
    %380 = vmatprep.subr.mxu0 0.0
    %v381 = vand.u32 %v76, 4294901760
    %v382 = vsub.f32 %v76, %v381
    %383 = vmatpush1.msra.mxu0 %v382
    %384 = vmatprep.subr.mxu0 0.0
    %v385 = vand.u32 %v77, 4294901760
    %v386 = vsub.f32 %v77, %v385
    %387 = vmatpush1.msra.mxu0 %v386
    %388 = vmatprep.subr.mxu0 0.0
    %v389 = vand.u32 %v78, 4294901760
    %v390 = vsub.f32 %v78, %v389
    %391 = vmatpush1.msra.mxu0 %v390
    %392 = vmatprep.subr.mxu0 0.0
    %v393 = vand.u32 %v79, 4294901760
    %v394 = vsub.f32 %v79, %v393
    %395 = vmatpush1.msra.mxu0 %v394
    %396 = vmatprep.subr.mxu0 0.0
    %v397 = vand.u32 %v80, 4294901760
    %v398 = vsub.f32 %v80, %v397
    %399 = vmatpush1.msra.mxu0 %v398
    %400 = vmatprep.subr.mxu0 0.0
    %v401 = vand.u32 %v81, 4294901760
    %v402 = vsub.f32 %v81, %v401
    %403 = vmatpush1.msra.mxu0 %v402
    %404 = vmatprep.subr.mxu0 0.0
    %405 = vmatpush1.msra.mxu0 0.0
    %406 = vmatprep.subr.mxu0 0.0
    %407 = vmatpush1.msra.mxu0 0.0
    %408 = vmatprep.subr.mxu0 0.0
    %409 = vmatpush1.msra.mxu0 0.0
    %410 = vmatprep.subr.mxu0 0.0
    %411 = vmatpush1.msra.mxu0 0.0
    %412 = vmatprep.subr.mxu0 0.0
    %413 = vmatpush1.msra.mxu0 0.0
    %414 = vmatprep.subr.mxu0 0.0
    %415 = vmatpush1.msra.mxu0 0.0
    %416 = vmatprep.subr.mxu0 0.0
    %417 = vmatpush1.msra.mxu0 0.0
    %418 = vmatprep.subr.mxu0 0.0
    %419 = vmatpush1.msra.mxu0 0.0
    %420 = vmatprep.subr.mxu0 0.0
    %421 = vmatpush1.msra.mxu0 0.0
    %422 = vmatprep.subr.mxu0 0.0
    %423 = vmatpush1.msra.mxu0 0.0
    %424 = vmatprep.subr.mxu0 0.0
    %425 = vmatpush1.msra.mxu0 0.0
    %426 = vmatprep.subr.mxu0 0.0
    %427 = vmatpush1.msra.mxu0 0.0
    %428 = vmatprep.subr.mxu0 0.0
    %429 = vmatpush1.msra.mxu0 0.0
    %430 = vmatprep.subr.mxu0 0.0
    %431 = vmatpush1.msra.mxu0 0.0
    %432 = vmatprep.subr.mxu0 0.0
    %433 = vmatpush1.msra.mxu0 0.0
    %434 = vmatprep.subr.mxu0 0.0
    %435 = vmatpush1.msra.mxu0 0.0
    %436 = vmatprep.mubr.f32.mxu0 0.0
    %v437 = vand.u32 %v64, 4294901760
    %v438 = vsub.f32 %v64, %v437
    %439 = vmatmul.mubr.f32.gmra.mrb[0].mxu0 %v438
    %v440 = vpop.f32.mrb[0].mxu0
    %v441 = vadd.f32 %v331, %v440
    %v442 = vpop.f32.mrb[0].mxu0
    %443 = vmatprep.mubr.f32.mxu0 0.0
    %v444 = vand.u32 %v65, 4294901760
    %v445 = vsub.f32 %v65, %v444
    %446 = vmatmul.mubr.f32.gmra.mrb[0].mxu0 %v445
    %v447 = vpop.f32.mrb[0].mxu0
    %v448 = vadd.f32 %v337, %v447
    %v449 = vpop.f32.mrb[0].mxu0
    %450 = vdwg.mxu0
    %451 = vmatprep.subr.mxu0 0.0
    %v452 = vand.u32 %v66, 4294901760
    %453 = vmatpush1.msra.mxu0 %v452
    %454 = vmatprep.subr.mxu0 0.0
    %v455 = vand.u32 %v67, 4294901760
    %456 = vmatpush1.msra.mxu0 %v455
    %457 = vmatprep.subr.mxu0 0.0
    %v458 = vand.u32 %v68, 4294901760
    %459 = vmatpush1.msra.mxu0 %v458
    %460 = vmatprep.subr.mxu0 0.0
    %v461 = vand.u32 %v69, 4294901760
    %462 = vmatpush1.msra.mxu0 %v461
    %463 = vmatprep.subr.mxu0 0.0
    %v464 = vand.u32 %v70, 4294901760
    %465 = vmatpush1.msra.mxu0 %v464
    %466 = vmatprep.subr.mxu0 0.0
    %v467 = vand.u32 %v71, 4294901760
    %468 = vmatpush1.msra.mxu0 %v467
    %469 = vmatprep.subr.mxu0 0.0
    %v470 = vand.u32 %v72, 4294901760
    %471 = vmatpush1.msra.mxu0 %v470
    %472 = vmatprep.subr.mxu0 0.0
    %v473 = vand.u32 %v73, 4294901760
    %474 = vmatpush1.msra.mxu0 %v473
    %475 = vmatprep.subr.mxu0 0.0
    %v476 = vand.u32 %v74, 4294901760
    %477 = vmatpush1.msra.mxu0 %v476
    %478 = vmatprep.subr.mxu0 0.0
    %v479 = vand.u32 %v75, 4294901760
    %480 = vmatpush1.msra.mxu0 %v479
    %481 = vmatprep.subr.mxu0 0.0
    %v482 = vand.u32 %v76, 4294901760
    %483 = vmatpush1.msra.mxu0 %v482
    %484 = vmatprep.subr.mxu0 0.0
    %v485 = vand.u32 %v77, 4294901760
    %486 = vmatpush1.msra.mxu0 %v485
    %487 = vmatprep.subr.mxu0 0.0
    %v488 = vand.u32 %v78, 4294901760
    %489 = vmatpush1.msra.mxu0 %v488
    %490 = vmatprep.subr.mxu0 0.0
    %v491 = vand.u32 %v79, 4294901760
    %492 = vmatpush1.msra.mxu0 %v491
    %493 = vmatprep.subr.mxu0 0.0
    %v494 = vand.u32 %v80, 4294901760
    %495 = vmatpush1.msra.mxu0 %v494
    %496 = vmatprep.subr.mxu0 0.0
    %v497 = vand.u32 %v81, 4294901760
    %498 = vmatpush1.msra.mxu0 %v497
    %499 = vmatprep.subr.mxu0 0.0
    %500 = vmatpush1.msra.mxu0 0.0
    %501 = vmatprep.subr.mxu0 0.0
    %502 = vmatpush1.msra.mxu0 0.0
    %503 = vmatprep.subr.mxu0 0.0
    %504 = vmatpush1.msra.mxu0 0.0
    %505 = vmatprep.subr.mxu0 0.0
    %506 = vmatpush1.msra.mxu0 0.0
    %507 = vmatprep.subr.mxu0 0.0
    %508 = vmatpush1.msra.mxu0 0.0
    %509 = vmatprep.subr.mxu0 0.0
    %510 = vmatpush1.msra.mxu0 0.0
    %511 = vmatprep.subr.mxu0 0.0
    %512 = vmatpush1.msra.mxu0 0.0
    %513 = vmatprep.subr.mxu0 0.0
    %514 = vmatpush1.msra.mxu0 0.0
    %515 = vmatprep.subr.mxu0 0.0
    %516 = vmatpush1.msra.mxu0 0.0
    %517 = vmatprep.subr.mxu0 0.0
    %518 = vmatpush1.msra.mxu0 0.0
    %519 = vmatprep.subr.mxu0 0.0
    %520 = vmatpush1.msra.mxu0 0.0
    %521 = vmatprep.subr.mxu0 0.0
    %522 = vmatpush1.msra.mxu0 0.0
    %523 = vmatprep.subr.mxu0 0.0
    %524 = vmatpush1.msra.mxu0 0.0
    %525 = vmatprep.subr.mxu0 0.0
    %526 = vmatpush1.msra.mxu0 0.0
    %527 = vmatprep.subr.mxu0 0.0
    %528 = vmatpush1.msra.mxu0 0.0
    %529 = vmatprep.subr.mxu0 0.0
    %530 = vmatpush1.msra.mxu0 0.0
    %531 = vmatprep.mubr.f32.mxu0 0.0
    %v532 = vand.u32 %v64, 4294901760
    %v533 = vsub.f32 %v64, %v532
    %v534 = vand.u32 %v533, 4294901760
    %535 = vmatmul.mubr.f32.gmra.mrb[0].mxu0 %v534
    %v536 = vpop.f32.mrb[0].mxu0
    %v537 = vadd.f32 %v441, %v536
    %v538 = vpop.f32.mrb[0].mxu0
    %539 = vmatprep.mubr.f32.mxu0 0.0
    %v540 = vand.u32 %v65, 4294901760
    %v541 = vsub.f32 %v65, %v540
    %v542 = vand.u32 %v541, 4294901760
    %543 = vmatmul.mubr.f32.gmra.mrb[0].mxu0 %v542
    %v544 = vpop.f32.mrb[0].mxu0
    %v545 = vadd.f32 %v448, %v544
    %v546 = vpop.f32.mrb[0].mxu0
    %547 = vdwg.mxu0
    %548 = vmatprep.subr.mxu0 0.0
    %v549 = vand.u32 %v66, 4294901760
    %v550 = vsub.f32 %v66, %v549
    %v551 = vand.u32 %v550, 4294901760
    %552 = vmatpush1.msra.mxu0 %v551
    %553 = vmatprep.subr.mxu0 0.0
    %v554 = vand.u32 %v67, 4294901760
    %v555 = vsub.f32 %v67, %v554
    %v556 = vand.u32 %v555, 4294901760
    %557 = vmatpush1.msra.mxu0 %v556
    %558 = vmatprep.subr.mxu0 0.0
    %v559 = vand.u32 %v68, 4294901760
    %v560 = vsub.f32 %v68, %v559
    %v561 = vand.u32 %v560, 4294901760
    %562 = vmatpush1.msra.mxu0 %v561
    %563 = vmatprep.subr.mxu0 0.0
    %v564 = vand.u32 %v69, 4294901760
    %v565 = vsub.f32 %v69, %v564
    %v566 = vand.u32 %v565, 4294901760
    %567 = vmatpush1.msra.mxu0 %v566
    %568 = vmatprep.subr.mxu0 0.0
    %v569 = vand.u32 %v70, 4294901760
    %v570 = vsub.f32 %v70, %v569
    %v571 = vand.u32 %v570, 4294901760
    %572 = vmatpush1.msra.mxu0 %v571
    %573 = vmatprep.subr.mxu0 0.0
    %v574 = vand.u32 %v71, 4294901760
    %v575 = vsub.f32 %v71, %v574
    %v576 = vand.u32 %v575, 4294901760
    %577 = vmatpush1.msra.mxu0 %v576
    %578 = vmatprep.subr.mxu0 0.0
    %v579 = vand.u32 %v72, 4294901760
    %v580 = vsub.f32 %v72, %v579
    %v581 = vand.u32 %v580, 4294901760
    %582 = vmatpush1.msra.mxu0 %v581
    %583 = vmatprep.subr.mxu0 0.0
    %v584 = vand.u32 %v73, 4294901760
    %v585 = vsub.f32 %v73, %v584
    %v586 = vand.u32 %v585, 4294901760
    %587 = vmatpush1.msra.mxu0 %v586
    %588 = vmatprep.subr.mxu0 0.0
    %v589 = vand.u32 %v74, 4294901760
    %v590 = vsub.f32 %v74, %v589
    %v591 = vand.u32 %v590, 4294901760
    %592 = vmatpush1.msra.mxu0 %v591
    %593 = vmatprep.subr.mxu0 0.0
    %v594 = vand.u32 %v75, 4294901760
    %v595 = vsub.f32 %v75, %v594
    %v596 = vand.u32 %v595, 4294901760
    %597 = vmatpush1.msra.mxu0 %v596
    %598 = vmatprep.subr.mxu0 0.0
    %v599 = vand.u32 %v76, 4294901760
    %v600 = vsub.f32 %v76, %v599
    %v601 = vand.u32 %v600, 4294901760
    %602 = vmatpush1.msra.mxu0 %v601
    %603 = vmatprep.subr.mxu0 0.0
    %v604 = vand.u32 %v77, 4294901760
    %v605 = vsub.f32 %v77, %v604
    %v606 = vand.u32 %v605, 4294901760
    %607 = vmatpush1.msra.mxu0 %v606
    %608 = vmatprep.subr.mxu0 0.0
    %v609 = vand.u32 %v78, 4294901760
    %v610 = vsub.f32 %v78, %v609
    %v611 = vand.u32 %v610, 4294901760
    %612 = vmatpush1.msra.mxu0 %v611
    %613 = vmatprep.subr.mxu0 0.0
    %v614 = vand.u32 %v79, 4294901760
    %v615 = vsub.f32 %v79, %v614
    %v616 = vand.u32 %v615, 4294901760
    %617 = vmatpush1.msra.mxu0 %v616
    %618 = vmatprep.subr.mxu0 0.0
    %v619 = vand.u32 %v80, 4294901760
    %v620 = vsub.f32 %v80, %v619
    %v621 = vand.u32 %v620, 4294901760
    %622 = vmatpush1.msra.mxu0 %v621
    %623 = vmatprep.subr.mxu0 0.0
    %v624 = vand.u32 %v81, 4294901760
    %v625 = vsub.f32 %v81, %v624
    %v626 = vand.u32 %v625, 4294901760
    %627 = vmatpush1.msra.mxu0 %v626
    %628 = vmatprep.subr.mxu0 0.0
    %629 = vmatpush1.msra.mxu0 0.0
    %630 = vmatprep.subr.mxu0 0.0
    %631 = vmatpush1.msra.mxu0 0.0
    %632 = vmatprep.subr.mxu0 0.0
    %633 = vmatpush1.msra.mxu0 0.0
    %634 = vmatprep.subr.mxu0 0.0
    %635 = vmatpush1.msra.mxu0 0.0
    %636 = vmatprep.subr.mxu0 0.0
    %637 = vmatpush1.msra.mxu0 0.0
    %638 = vmatprep.subr.mxu0 0.0
    %639 = vmatpush1.msra.mxu0 0.0
    %640 = vmatprep.subr.mxu0 0.0
    %641 = vmatpush1.msra.mxu0 0.0
    %642 = vmatprep.subr.mxu0 0.0
    %643 = vmatpush1.msra.mxu0 0.0
    %644 = vmatprep.subr.mxu0 0.0
    %645 = vmatpush1.msra.mxu0 0.0
    %646 = vmatprep.subr.mxu0 0.0
    %647 = vmatpush1.msra.mxu0 0.0
    %648 = vmatprep.subr.mxu0 0.0
    %649 = vmatpush1.msra.mxu0 0.0
    %650 = vmatprep.subr.mxu0 0.0
    %651 = vmatpush1.msra.mxu0 0.0
    %652 = vmatprep.subr.mxu0 0.0
    %653 = vmatpush1.msra.mxu0 0.0
    %654 = vmatprep.subr.mxu0 0.0
    %655 = vmatpush1.msra.mxu0 0.0
    %656 = vmatprep.subr.mxu0 0.0
    %657 = vmatpush1.msra.mxu0 0.0
    %658 = vmatprep.subr.mxu0 0.0
    %659 = vmatpush1.msra.mxu0 0.0
    %660 = vmatprep.mubr.f32.mxu0 0.0
    %v661 = vand.u32 %v64, 4294901760
    %662 = vmatmul.mubr.f32.gmra.mrb[0].mxu0 %v661
    %v663 = vpop.f32.mrb[0].mxu0
    %v664 = vadd.f32 %v537, %v663
    %v665 = vpop.f32.mrb[0].mxu0
    %666 = vmatprep.mubr.f32.mxu0 0.0
    %v667 = vand.u32 %v65, 4294901760
    %668 = vmatmul.mubr.f32.gmra.mrb[0].mxu0 %v667
    %v669 = vpop.f32.mrb[0].mxu0
    %v670 = vadd.f32 %v545, %v669
    %v671 = vpop.f32.mrb[0].mxu0
    %672 = vdwg.mxu0
    %673 = vmatprep.subr.mxu0 0.0
    %v674 = vand.u32 %v66, 4294901760
    %675 = vmatpush1.msra.mxu0 %v674
    %676 = vmatprep.subr.mxu0 0.0
    %v677 = vand.u32 %v67, 4294901760
    %678 = vmatpush1.msra.mxu0 %v677
    %679 = vmatprep.subr.mxu0 0.0
    %v680 = vand.u32 %v68, 4294901760
    %681 = vmatpush1.msra.mxu0 %v680
    %682 = vmatprep.subr.mxu0 0.0
    %v683 = vand.u32 %v69, 4294901760
    %684 = vmatpush1.msra.mxu0 %v683
    %685 = vmatprep.subr.mxu0 0.0
    %v686 = vand.u32 %v70, 4294901760
    %687 = vmatpush1.msra.mxu0 %v686
    %688 = vmatprep.subr.mxu0 0.0
    %v689 = vand.u32 %v71, 4294901760
    %690 = vmatpush1.msra.mxu0 %v689
    %691 = vmatprep.subr.mxu0 0.0
    %v692 = vand.u32 %v72, 4294901760
    %693 = vmatpush1.msra.mxu0 %v692
    %694 = vmatprep.subr.mxu0 0.0
    %v695 = vand.u32 %v73, 4294901760
    %696 = vmatpush1.msra.mxu0 %v695
    %697 = vmatprep.subr.mxu0 0.0
    %v698 = vand.u32 %v74, 4294901760
    %699 = vmatpush1.msra.mxu0 %v698
    %700 = vmatprep.subr.mxu0 0.0
    %v701 = vand.u32 %v75, 4294901760
    %702 = vmatpush1.msra.mxu0 %v701
    %703 = vmatprep.subr.mxu0 0.0
    %v704 = vand.u32 %v76, 4294901760
    %705 = vmatpush1.msra.mxu0 %v704
    %706 = vmatprep.subr.mxu0 0.0
    %v707 = vand.u32 %v77, 4294901760
    %708 = vmatpush1.msra.mxu0 %v707
    %709 = vmatprep.subr.mxu0 0.0
    %v710 = vand.u32 %v78, 4294901760
    %711 = vmatpush1.msra.mxu0 %v710
    %712 = vmatprep.subr.mxu0 0.0
    %v713 = vand.u32 %v79, 4294901760
    %714 = vmatpush1.msra.mxu0 %v713
    %715 = vmatprep.subr.mxu0 0.0
    %v716 = vand.u32 %v80, 4294901760
    %717 = vmatpush1.msra.mxu0 %v716
    %718 = vmatprep.subr.mxu0 0.0
    %v719 = vand.u32 %v81, 4294901760
    %720 = vmatpush1.msra.mxu0 %v719
    %721 = vmatprep.subr.mxu0 0.0
    %722 = vmatpush1.msra.mxu0 0.0
    %723 = vmatprep.subr.mxu0 0.0
    %724 = vmatpush1.msra.mxu0 0.0
    %725 = vmatprep.subr.mxu0 0.0
    %726 = vmatpush1.msra.mxu0 0.0
    %727 = vmatprep.subr.mxu0 0.0
    %728 = vmatpush1.msra.mxu0 0.0
    %729 = vmatprep.subr.mxu0 0.0
    %730 = vmatpush1.msra.mxu0 0.0
    %731 = vmatprep.subr.mxu0 0.0
    %732 = vmatpush1.msra.mxu0 0.0
    %733 = vmatprep.subr.mxu0 0.0
    %734 = vmatpush1.msra.mxu0 0.0
    %735 = vmatprep.subr.mxu0 0.0
    %736 = vmatpush1.msra.mxu0 0.0
    %737 = vmatprep.subr.mxu0 0.0
    %738 = vmatpush1.msra.mxu0 0.0
    %739 = vmatprep.subr.mxu0 0.0
    %740 = vmatpush1.msra.mxu0 0.0
    %741 = vmatprep.subr.mxu0 0.0
    %742 = vmatpush1.msra.mxu0 0.0
    %743 = vmatprep.subr.mxu0 0.0
    %744 = vmatpush1.msra.mxu0 0.0
    %745 = vmatprep.subr.mxu0 0.0
    %746 = vmatpush1.msra.mxu0 0.0
    %747 = vmatprep.subr.mxu0 0.0
    %748 = vmatpush1.msra.mxu0 0.0
    %749 = vmatprep.subr.mxu0 0.0
    %750 = vmatpush1.msra.mxu0 0.0
    %751 = vmatprep.subr.mxu0 0.0
    %752 = vmatpush1.msra.mxu0 0.0
    %753 = vmatprep.mubr.f32.mxu0 0.0
    %v754 = vand.u32 %v64, 4294901760
    %755 = vmatmul.mubr.f32.gmra.mrb[0].mxu0 %v754
    %v756 = vpop.f32.mrb[0].mxu0
    %v757 = vadd.f32 %v664, %v756
    %v758 = vpop.f32.mrb[0].mxu0
    %759 = vmatprep.mubr.f32.mxu0 0.0
    %v760 = vand.u32 %v65, 4294901760
    %761 = vmatmul.mubr.f32.gmra.mrb[0].mxu0 %v760
    %v762 = vpop.f32.mrb[0].mxu0
    %v763 = vadd.f32 %v670, %v762
    %v764 = vpop.f32.mrb[0].mxu0
    %765 = vdwg.mxu0
    %v766 = vadd.s32 %v23, 128
    %v767 = vshra.s32 %v23, 1
    %v768 = vshra.s32 %v766, 1
    %vm769 = vcmp.eq.s32.totalorder %v767, %v45
    %vm770 = vcmp.eq.s32.totalorder %v768, %v45
    %vm771 = vcmp.eq.s32.totalorder %v767, %v59
    %vm772 = vcmp.eq.s32.totalorder %v768, %v59
    %v773 = vand.u32 %v23, 1
    %v774 = vand.u32 %v766, 1
    %vm775 = vcmp.eq.s32.totalorder %v773, 0
    %vm776 = vcmp.eq.s32.totalorder %v774, 0
    %vm777 = vmand %vm769, %vm775
    %vm778 = vmand %vm770, %vm776
    %vm779 = vmand %vm771, %vm775
    %vm780 = vmand %vm772, %vm776
    %v781 = vsel %vm777, %v15, 0.0
    %v782 = vsel %vm778, %v16, 0.0
    %v783 = vsel %vm779, %v18, 0.0
    %v784 = vsel %vm780, %v19, 0.0
    %v785 = vadd.f32 %v781, %v782
    %786 = vadd.xlane.f32.xlu0 %v785
    %v787 = vpop.xlane.xlu0 %786
    %v788 = vadd.f32 %v783, %v784
    %789 = vadd.xlane.f32.xlu0 %v788
    %v790 = vpop.xlane.xlu0 %789
    %vm791 = vmxor %vm775, 1
    %vm792 = vmxor %vm776, 1
    %vm793 = vmand %vm769, %vm791
    %vm794 = vmand %vm770, %vm792
    %vm795 = vmand %vm771, %vm791
    %vm796 = vmand %vm772, %vm792
    %v797 = vsel %vm793, %v15, 0.0
    %v798 = vsel %vm794, %v16, 0.0
    %v799 = vsel %vm795, %v18, 0.0
    %v800 = vsel %vm796, %v19, 0.0
    %v801 = vadd.f32 %v797, %v798
    %802 = vadd.xlane.f32.xlu0 %v801
    %v803 = vpop.xlane.xlu0 %802
    %v804 = vadd.f32 %v799, %v800
    %805 = vadd.xlane.f32.xlu0 %v804
    %v806 = vpop.xlane.xlu0 %805
    %v807 = vtanh.pop %v787
    %v808 = vtanh.pop %v790
    %v809 = vmul.f32 %v807, 1.2
    %v810 = vmul.f32 %v808, 1.2
    %v811 = vtanh.pop %v803
    %v812 = vtanh.pop %v806
    %v813 = vmul.f32 %v811, 1.2
    %v814 = vmul.f32 %v812, 1.2
    %vm815 = vcmp.gt.f32.partialorder %v809, 0.0
    %vm816 = vcmp.gt.f32.partialorder %v810, 0.0
    %819 = vrot.lane.b32.xlu0 %v757, 126
    %v820 = vpop.permute.xlu0 %819
    %821 = vrot.lane.b32.xlu0 %v763, 126
    %v822 = vpop.permute.xlu0 %821
    %v825 = vsel %vm815, %v757, %v820
    %v826 = vsel %vm816, %v763, %v822
    %vm827 = vcmp.gt.f32.partialorder %v813, 0.0
    %vm828 = vcmp.gt.f32.partialorder %v814, 0.0
    %v829 = vsel %vm827, %v757, %v820
    %v830 = vsel %vm828, %v763, %v822
    %v831 = vmul.f32 %v809, %v825
    %v832 = vmul.f32 %v810, %v826
    %835 = vrot.lane.b32.xlu0 %v831, 126
    %v836 = vpop.permute.xlu0 %835
    %837 = vrot.lane.b32.xlu0 %v832, 126
    %v838 = vpop.permute.xlu0 %837
    %v841 = vadd.f32 %v757, %v836
    %v842 = vadd.f32 %v763, %v838
    %v843 = vmax.f32 %v841, -1.0
    %v844 = vmax.f32 %v842, -1.0
    %v845 = vmin.f32 %v843, 1.0
    %v846 = vmin.f32 %v844, 1.0
    %v847 = vmul.f32 %v845, 90.0
    %v848 = vmul.f32 %v846, 90.0
    %v849 = vmul.f32 %v813, %v829
    %v850 = vmul.f32 %v814, %v830
    %853 = vrot.lane.b32.xlu0 %v849, 126
    %v854 = vpop.permute.xlu0 %853
    %855 = vrot.lane.b32.xlu0 %v850, 126
    %v856 = vpop.permute.xlu0 %855
    %v859 = vadd.f32 %v757, %v854
    %v860 = vadd.f32 %v763, %v856
    %v861 = vmax.f32 %v859, -1.0
    %v862 = vmax.f32 %v860, -1.0
    %v863 = vmin.f32 %v861, 1.0
    %v864 = vmin.f32 %v862, 1.0
    %v865 = vmul.f32 %v863, 180.0
    %v866 = vmul.f32 %v864, 180.0
    %v867 = vrcp.pop %v825
    %v868 = vmul.f32 1.0, %v867
    %v869 = vrcp.pop %v826
    %v870 = vmul.f32 1.0, %v869
    %v871 = vrcp.pop %v829
    %v872 = vmul.f32 1.0, %v871
    %v873 = vrcp.pop %v830
    %v874 = vmul.f32 1.0, %v873
    %875 = vrot.lane.b32.xlu0 %v757, 4
    %v876 = vpop.permute.xlu0 %875
    %877 = vrot.lane.b32.xlu0 %v763, 4
    %v878 = vpop.permute.xlu0 %877
    %vm881 = vcmask 7168
    %v882 = vsel %vm881, %v847, %v865
    %v883 = vsel %vm881, %v848, %v866
    %vm884 = vcmask 15360
    %v885 = vsel %vm884, %v882, %v868
    %v886 = vsel %vm884, %v883, %v870
    %vm887 = vcmask 23552
    %v888 = vsel %vm887, %v885, %v872
    %v889 = vsel %vm887, %v886, %v874
    %vm890 = vcmask 31744
    %v891 = vsel %vm890, %v888, %v876
    %v892 = vsel %vm890, %v889, %v878
    %vm893 = vcmask 39936
    %v894 = vsel %vm893, %v891, %v876
    %v895 = vsel %vm893, %v892, %v878
    %vm896 = vcmask 48128
    %v897 = vsel %vm896, %v894, %v809
    %v898 = vsel %vm896, %v895, %v810
    %vm899 = vcmask 56320
    %v900 = vsel %vm899, %v897, %v813
    %v901 = vsel %vm899, %v898, %v814
    %vm902 = vcmask 64512
    %903 = vst.msk [vmem:[%s3] sm:$0xff] %vm902, %v900
    %904 = vst.msk [vmem:[%s3 + $0x8] sm:$0xff] %vm902, %v901
    // Predicated region
    $region10: #{tpu_custom_call.1} parent=1 // pred_check
      _
    $region11: #{tpu_custom_call.1} parent=1 // pred_check_branch
      %906 = sbr.rel (0) target = $region13
    $region12: #{tpu_custom_call.1} parent=1 // pred_region
      %s908 = ssub.s32 256, 256
      %909 = vsyncadd [#allocation3], %s908
      %s910 = sshll.u32 [#allocation2], 4
      %s911 = int_to_ptr.vmem [resolvable:$true] %s910
      %916 = dma.vmem_to_hbm [thread:$0]  %s911, 256, %s2, [#allocation3], 128, 128, 8
    $region13: #{tpu_custom_call.1} parent=1 // pred_fallthru
      _
    // Predicated region
    $region14: #{tpu_custom_call.1} parent=1 // pred_check
      _
    $region15: #{tpu_custom_call.1} parent=1 // pred_check_branch
      %918 = sbr.rel (0) target = $region17
    $region16: #{tpu_custom_call.1} parent=1 // pred_region
      _
    $region17: #{tpu_custom_call.1} parent=1 // pred_fallthru
      _
    // Predicated region
    $region18: #{tpu_custom_call.1} parent=1 // pred_check
      _
    $region19: #{tpu_custom_call.1} parent=1 // pred_check_branch
      %920 = sbr.rel (0) target = $region21
    $region20: #{tpu_custom_call.1} parent=1 // pred_region
      %921 = dma.done [#allocation3], 256
    $region21: #{tpu_custom_call.1} parent=1 // pred_fallthru
      _
    // Predicated region
    $region22: #{tpu_custom_call.1} parent=1 // pred_check
      _
    $region23: #{tpu_custom_call.1} parent=1 // pred_check_branch
      %923 = sbr.rel (0) target = $region25
    $region24: #{tpu_custom_call.1} parent=1 // pred_region
      _
    $region25: #{tpu_custom_call.1} parent=1 // pred_fallthru
      _
    %924 = vsyncpa [#allocation3], 1

</llo_original>
